<compile_context>
chip_gen: v7x
topology: tpu7x:2x2x1
jax: 0.10.0
libtpu: 0.0.40
codegen_flags: <defaults>
</compile_context>

<pallas_src>
import math

import jax
import jax.numpy as jnp
from jax.experimental import pallas as pl
from jax.experimental.pallas import tpu as pltpu

_LANES = 128
_SUBLANES = 8


def gaussian_log_prob_sum(x, mu, std, *, target_block_bytes=4 * 1024 * 1024):
    """x: (B, ...) float array. mu, std: Python floats.
    Returns (B,) float32 = sum over non-batch dims of Normal(mu, std).log_prob(x)."""
    mu = float(mu)
    std = float(std)
    B = x.shape[0]
    x_flat = x.reshape(B, -1)
    F = x_flat.shape[1]

    # Lane-dense layout: (B, F) -> (B, R, 128). If F is not a multiple of 128
    # (rare for CHW products), pad with mu: padded elements contribute exactly
    # 0 to sum((x - mu)^2), so no post-correction is needed.
    pad = (-F) % _LANES
    if pad:
        x_flat = jnp.pad(x_flat, ((0, 0), (0, pad)), constant_values=mu)
    R = x_flat.shape[1] // _LANES
    x3 = x_flat.reshape(B, R, _LANES)

    itemsize = x3.dtype.itemsize

    # --- Tile selection (sized from the input dtype, not hard-coded f32) ----
    # Per-batch-element row slab capped at ~1 MiB so tb can still reach >= 2.
    row_cap = max(_SUBLANES, (1024 * 1024) // (_LANES * itemsize))
    row_cap = (row_cap // _SUBLANES) * _SUBLANES
    tr = R if R <= row_cap else row_cap  # tr < R  =>  tr is a multiple of 8
    # Batch tile: fill the HBM block up to ~target_block_bytes; keep it a
    # divisor of B so batch tiles are never ragged.
    tb = max(1, min(B, target_block_bytes // (tr * _LANES * itemsize)))
    while B % tb:
        tb -= 1
    grid_b = B // tb

    T = pl.cdiv(R, tr)  # total row tiles per batch element
    # Megacore: make sure a "parallel" axis has extent >= 2 even when the
    # whole batch fits in one batch tile (v7x has 2 TensorCores per chip).
    if grid_b == 1 and T >= 2 and T % 2 == 0:
        n_chunks = 2
    else:
        n_chunks = 1
    grid_r = T // n_chunks

    full_tiles = R // tr            # row tiles with no ragged rows
    needs_mask = full_tiles != T    # only the global last tile can be ragged
    packed_acc = (tr % _SUBLANES) == 0  # False only when tr == R (single step)

    def kernel(x_ref, o_ref, acc_ref):
        c = pl.program_id(1)
        r = pl.program_id(2)

        s = x_ref[...].astype(jnp.float32) - mu
        sq = s * s

        if not packed_acc:
            # tr == R and not a multiple of 8: single reduction step per
            # (b, c); one sublane reduce straight into the lane-dense output.
            o_ref[...] = jnp.sum(sq, axis=1, keepdims=True)
            return

        @pl.when(r == 0)
        def _init():
            acc_ref[...] = jnp.zeros_like(acc_ref)

        def _accumulate(vals):
            # Within-block partial reduce (tb, tr, 128) -> (tb, 8, 128):
            # sublane-aligned regrouping + pure vreg adds, no cross-lane work.
            if tr == _SUBLANES:
                acc_ref[...] += vals
            else:
                acc_ref[...] += jnp.sum(
                    vals.reshape(tb, tr // _SUBLANES, _SUBLANES, _LANES), axis=1
                )

        if needs_mask:
            t = c * grid_r + r  # global row-tile index
            # Mask only runs on the ragged last tile; full tiles stay unmasked.
            @pl.when(t < full_tiles)
            def _hot():
                _accumulate(sq)

            @pl.when(t >= full_tiles)
            def _tail():
                rows = t * tr + jax.lax.broadcasted_iota(jnp.int32, sq.shape, 1)
                _accumulate(jnp.where(rows < R, sq, 0.0))
        else:
            _accumulate(sq)

        @pl.when(r == pl.num_programs(2) - 1)
        def _finalize():
            # Single 8->1 sublane (XLU) reduce per (b, c) tile; lane-dense
            # (tb, 1, 128) writeback -> unmasked vst.
            o_ref[...] = jnp.sum(acc_ref[...], axis=1, keepdims=True)

    partial = pl.pallas_call(
        kernel,
        out_shape=jax.ShapeDtypeStruct((B, n_chunks, _LANES), jnp.float32),
        grid=(grid_b, n_chunks, grid_r),
        in_specs=[
            pl.BlockSpec((tb, tr, _LANES), lambda b, c, r: (b, c * grid_r + r, 0))
        ],
        out_specs=pl.BlockSpec((tb, 1, _LANES), lambda b, c, r: (b, c, 0)),
        scratch_shapes=[pltpu.VMEM((tb, _SUBLANES, _LANES), jnp.float32)],
        compiler_params=pltpu.CompilerParams(
            dimension_semantics=("parallel", "parallel", "arbitrary"),
            vmem_limit_bytes=32 * 1024 * 1024,
        ),
    )(x3)

    # Final chunk + lane reduce and affine fold of the Gaussian constants,
    # done once on a tiny (B, n_chunks, 128) array in plain XLA.
    sum_sq = jnp.sum(partial, axis=(1, 2))
    neg_half_inv_var = -0.5 / (std * std)
    log_norm_const = -math.log(std) - 0.5 * math.log(2.0 * math.pi)
    return neg_half_inv_var * sum_sq + jnp.float32(F * log_norm_const)


if __name__ == "__main__":
    # Deterministic "parameters" of the Gaussian module (scalars as in
    # torch.distributions.Normal(mu, std)).
    MU = 0.3
    STD = 1.5

    key = jax.random.PRNGKey(0)
    x = jax.random.normal(key, (2, 4, 16, 16), dtype=jnp.float32)

    y = jax.block_until_ready(gaussian_log_prob_sum(x, MU, STD))

    # Pure-JAX reference (same math as torch.distributions.Normal.log_prob).
    xf = x.reshape(x.shape[0], -1)
    ref = jnp.sum(
        -0.5 * (xf - MU) ** 2 / (STD * STD)
        - jnp.log(STD)
        - 0.5 * jnp.log(2.0 * jnp.pi),
        axis=1,
    )
    assert jnp.allclose(y, ref, rtol=1e-5, atol=1e-3), (y, ref)

    print("KERNEL_OK")
</pallas_src>

<mosaic_0001>
module attributes {stable_mosaic.version = 11 : i64} {
  func.func @kernel(%arg0: i32, %arg1: i32, %arg2: i32, %arg3: memref<2x8x128xf32, #tpu.memory_space<vmem>>, %arg4: memref<2x1x128xf32, #tpu.memory_space<vmem>>, %arg5: memref<2x8x128xf32, #tpu.memory_space<vmem>>) attributes {dimension_semantics = [#tpu.dimension_semantics<parallel>, #tpu.dimension_semantics<parallel>, #tpu.dimension_semantics<arbitrary>], iteration_bounds = array<i64: 1, 1, 1>, scalar_prefetch = 0 : i64, scratch_operands = 1 : i64, tpu.core_type = #tpu.core_type<tc>, window_params = [{transform_indices = @transform_0, window_bounds = array<i64: 2, 8, 128>}, {transform_indices = @transform_1, window_bounds = array<i64: 2, 1, 128>}]} {
    %c0 = arith.constant 0 : index
    %c0_0 = arith.constant 0 : index
    %c0_1 = arith.constant 0 : index
    %0 = vector.load %arg3[%c0, %c0_0, %c0_1] : memref<2x8x128xf32, #tpu.memory_space<vmem>>, vector<2x8x128xf32>
    %cst = arith.constant 3.000000e-01 : f32
    %1 = vector.broadcast %cst : f32 to vector<2x8x128xf32>
    %2 = arith.subf %0, %1 : vector<2x8x128xf32>
    %3 = arith.mulf %2, %2 : vector<2x8x128xf32>
    %c0_i32 = arith.constant 0 : i32
    %4 = arith.cmpi eq, %arg2, %c0_i32 : i32
    %5 = arith.extui %4 : i1 to i32
    %c0_i32_2 = arith.constant 0 : i32
    %6 = arith.cmpi ne, %5, %c0_i32_2 : i32
    scf.if %6 {
      %cst_11 = arith.constant 0.000000e+00 : f32
      %13 = vector.broadcast %cst_11 : f32 to vector<2x8x128xf32>
      %c0_12 = arith.constant 0 : index
      %c0_13 = arith.constant 0 : index
      %c0_14 = arith.constant 0 : index
      %14 = vector.load %arg5[%c0_12, %c0_13, %c0_14] : memref<2x8x128xf32, #tpu.memory_space<vmem>>, vector<2x8x128xf32>
      tpu.vector_store %arg5[%c0_12, %c0_13, %c0_14], %13 {strides = array<i32>} : memref<2x8x128xf32, #tpu.memory_space<vmem>>, vector<2x8x128xf32>,
    } else {
    }
    %c0_3 = arith.constant 0 : index
    %c0_4 = arith.constant 0 : index
    %c0_5 = arith.constant 0 : index
    %7 = vector.load %arg5[%c0_3, %c0_4, %c0_5] : memref<2x8x128xf32, #tpu.memory_space<vmem>>, vector<2x8x128xf32>
    %8 = arith.addf %7, %3 : vector<2x8x128xf32>
    %c0_6 = arith.constant 0 : index
    %c0_7 = arith.constant 0 : index
    %c0_8 = arith.constant 0 : index
    %9 = vector.load %arg5[%c0_6, %c0_7, %c0_8] : memref<2x8x128xf32, #tpu.memory_space<vmem>>, vector<2x8x128xf32>
    tpu.vector_store %arg5[%c0_6, %c0_7, %c0_8], %8 {strides = array<i32>} : memref<2x8x128xf32, #tpu.memory_space<vmem>>, vector<2x8x128xf32>,
    %c0_i32_9 = arith.constant 0 : i32
    %10 = arith.cmpi eq, %arg2, %c0_i32_9 : i32
    %11 = arith.extui %10 : i1 to i32
    %c0_i32_10 = arith.constant 0 : i32
    %12 = arith.cmpi ne, %11, %c0_i32_10 : i32
    scf.if %12 {
      %c0_11 = arith.constant 0 : index
      %c0_12 = arith.constant 0 : index
      %c0_13 = arith.constant 0 : index
      %13 = vector.load %arg5[%c0_11, %c0_12, %c0_13] : memref<2x8x128xf32, #tpu.memory_space<vmem>>, vector<2x8x128xf32>
      %cst_14 = arith.constant dense<0.000000e+00> : vector<2x128xf32>
      %14 = vector.multi_reduction <add>, %13, %cst_14 [1] : vector<2x8x128xf32> to vector<2x128xf32>
      %15 = vector.shape_cast %14 : vector<2x128xf32> to vector<2x1x128xf32>
      %c0_15 = arith.constant 0 : index
      %c0_16 = arith.constant 0 : index
      %c0_17 = arith.constant 0 : index
      %16 = vector.load %arg4[%c0_15, %c0_16, %c0_17] : memref<2x1x128xf32, #tpu.memory_space<vmem>>, vector<2x1x128xf32>
      tpu.vector_store %arg4[%c0_15, %c0_16, %c0_17], %15 {strides = array<i32>} : memref<2x1x128xf32, #tpu.memory_space<vmem>>, vector<2x1x128xf32>,
    } else {
    }
    return
  }
  func.func @transform_0(%arg0: i32, %arg1: i32, %arg2: i32) -> (i32, i32, i32) {
    %c1_i32 = arith.constant 1 : i32
    %0 = arith.muli %arg1, %c1_i32 : i32
    %1 = arith.addi %0, %arg2 : i32
    %c0_i32 = arith.constant 0 : i32
    %c0_i32_0 = arith.constant 0 : i32
    return %arg0, %1, %c0_i32 : i32, i32, i32
  }
  func.func @transform_1(%arg0: i32, %arg1: i32, %arg2: i32) -> (i32, i32, i32) {
    %c0_i32 = arith.constant 0 : i32
    %c0_i32_0 = arith.constant 0 : i32
    return %arg0, %arg1, %c0_i32 : i32, i32, i32
  }
}

</mosaic_0001>

<llo_original>
// kernel: tpu_custom_call.1
$region0: #{tpu_custom_call.1}
  #allocation0 [shape = 'u32[]', space=smem, size = 0x4, offset = 0x4, fixed_abs, tag = 'smem constant byte address 0x4 - core index']
  #allocation1 [shape = 'u32[144,128]{1,0:T(1,128)}', space=vmem, size = 0x12000, scoped, tag = 'internal scratch']
  #allocation2 [shape = 'f32[2,8,128]{2,1,0:T(8,128)}', space=vmem, size = 0x2000, scoped, tag = 'scratch operand']
  %s0 = inlined_call_operand.hbm [shape: f32[2,8,128], index: 0, kind: input, shape index: {}]
  %s1 = inlined_call_operand.hbm [shape: f32[2,1,128], index: 1, kind: output, shape index: {}]
  %s2 = sld [smem:[#allocation0]]
  $region26: #{tpu_custom_call.1} parent=0
    _
  %s4 = ssub.s32 1, %s2
  %s5 = scalar_select 0, %s4, %s2
  $region1: #{tpu_custom_call.1} parent=0
    #allocation3 [shape = 'u8[8192]{0}', space=vmem, size = 0x2000, scoped, tag = 'input window, operand 0, single buffered']
    #allocation4 [shape = 's32[1]{0}', space=sflag, size = 0x4, scoped, tag = 'scoped memory for tpu_custom_call.1']
    #allocation5 [shape = 's32[1]{0}', space=sflag, size = 0x4, scoped, tag = 'scoped memory for tpu_custom_call.1']
    #allocation6 [shape = 'u8[1024]{0}', space=vmem, size = 0x400, scoped, tag = 'output window, operand 0, single buffered']
    %6 = vsyncpa [#allocation4], 0
    %7 = vsyncpa [#allocation5], 0
    // Predicated region
    $region2: #{tpu_custom_call.1} parent=1 // pred_check
      _
    $region3: #{tpu_custom_call.1} parent=1 // pred_check_branch
      %9 = sbr.rel (0) target = $region5
    $region4: #{tpu_custom_call.1} parent=1 // pred_region
      %s10 = sadd.s32 0, 0
      %s12 = ssub.s32 256, 256
      %13 = vsyncadd [#allocation4], %s12
      %s14 = smul.addr %s10, 128
      %s15 = scalar_lea.hbm %s0, %s14
      %s16 = sshll.u32 [#allocation3], 4
      %s17 = int_to_ptr.vmem [resolvable:$true] %s16
      %22 = dma.hbm_to_vmem [thread:$0]  %s15, 256, %s17, [#allocation4], 128, 128, 8
    $region5: #{tpu_custom_call.1} parent=1 // pred_fallthru
      _
    // Predicated region
    $region6: #{tpu_custom_call.1} parent=1 // pred_check
      _
    $region7: #{tpu_custom_call.1} parent=1 // pred_check_branch
      %24 = sbr.rel (0) target = $region9
    $region8: #{tpu_custom_call.1} parent=1 // pred_region
      %25 = dma.done [#allocation4], 256
    $region9: #{tpu_custom_call.1} parent=1 // pred_fallthru
      _
    %s26 = sadd.s32 0, 0
    %v27 = vld [vmem:[#allocation3] sm:$0xff]
    %v28 = vld [vmem:[#allocation3 + $0x8] sm:$0xff]
    %v29 = vsub.f32 %v27, 0.3
    %v30 = vsub.f32 %v28, 0.3
    %v31 = vmul.f32 %v29, %v29
    %v32 = vmul.f32 %v30, %v30
    %p33 = scmp.eq.s32.totalorder 0, 0
    // Predicated region
    $region10: #{tpu_custom_call.1} parent=1 // pred_check
      %p34 = pneg %p33
    $region11: #{tpu_custom_call.1} parent=1 // pred_check_branch
      %36 = sbr.rel (%p34) target = $region13
    $region12: #{tpu_custom_call.1} parent=1 // pred_region
      %37 = vst [vmem:[#allocation2] sm:$0xff] 0.0
      %38 = vst [vmem:[#allocation2 + $0x8] sm:$0xff] 0.0
    $region13: #{tpu_custom_call.1} parent=1 // pred_fallthru
      _
    %v39 = vld [vmem:[#allocation2] sm:$0xff]
    %v40 = vld [vmem:[#allocation2 + $0x8] sm:$0xff]
    %v41 = vadd.f32 %v39, %v31
    %v42 = vadd.f32 %v40, %v32
    %43 = vst [vmem:[#allocation2] sm:$0xff] %v41
    %44 = vst [vmem:[#allocation2 + $0x8] sm:$0xff] %v42
    // Predicated region
    $region14: #{tpu_custom_call.1} parent=1 // pred_check
      %p45 = pneg %p33
    $region15: #{tpu_custom_call.1} parent=1 // pred_check_branch
      %47 = sbr.rel (%p45) target = $region17
    $region16: #{tpu_custom_call.1} parent=1 // pred_region
      %v48 = vld [vmem:[#allocation2] sm:$0xff]
      %v49 = vld [vmem:[#allocation2 + $0x8] sm:$0xff]
      %v50 = vrot.slane %v48, 4
      %v51 = vadd.f32 %v48, %v50
      %v52 = vrot.slane %v51, 2
      %v53 = vadd.f32 %v51, %v52
      %v54 = vrot.slane %v53, 1
      %v55 = vadd.f32 %v53, %v54
      %v56 = vrot.slane %v49, 4
      %v57 = vadd.f32 %v49, %v56
      %v58 = vrot.slane %v57, 2
      %v59 = vadd.f32 %v57, %v58
      %v60 = vrot.slane %v59, 1
      %v61 = vadd.f32 %v59, %v60
      %62 = vst [vmem:[#allocation6] sm:$0x1] %v55
      %63 = vst [vmem:[#allocation6 + $0x1] sm:$0x1] %v61
    $region17: #{tpu_custom_call.1} parent=1 // pred_fallthru
      _
    // Predicated region
    $region18: #{tpu_custom_call.1} parent=1 // pred_check
      _
    $region19: #{tpu_custom_call.1} parent=1 // pred_check_branch
      %65 = sbr.rel (0) target = $region21
    $region20: #{tpu_custom_call.1} parent=1 // pred_region
      %s67 = ssub.s32 32, 32
      %68 = vsyncadd [#allocation5], %s67
      %s69 = sshll.u32 [#allocation6], 4
      %s70 = int_to_ptr.vmem [resolvable:$true] %s69
      %75 = dma.vmem_to_hbm [thread:$0]  %s70, 32, %s1, [#allocation5], 16, 16, 1
    $region21: #{tpu_custom_call.1} parent=1 // pred_fallthru
      _
    // Predicated region
    $region22: #{tpu_custom_call.1} parent=1 // pred_check
      _
    $region23: #{tpu_custom_call.1} parent=1 // pred_check_branch
      %77 = sbr.rel (0) target = $region25
    $region24: #{tpu_custom_call.1} parent=1 // pred_region
      %78 = dma.done [#allocation5], 32
    $region25: #{tpu_custom_call.1} parent=1 // pred_fallthru
      _
    %79 = vsyncpa [#allocation4], 1
    %80 = vsyncpa [#allocation5], 1

</llo_original>
